<compile_context>
chip_gen: v5e
topology: v5e:2x2
jax: 0.10.0
libtpu: 0.0.40
codegen_flags: <defaults>
</compile_context>

<pallas_src>
import jax
import jax.numpy as jnp
from jax import lax
from jax.experimental import pallas as pl
from jax.experimental.pallas import tpu as pltpu


def _self_attention_kernel(x_ref, w_ref, vl_ref, out_ref, a_ref):
    x = x_ref[...].astype(jnp.float32)          # (bb, S, F)
    w = w_ref[...].astype(jnp.float32)          # (1, F)  lane-major weight row
    vl = vl_ref[...]                            # (bb, 1) int32 valid lengths

    bb, S, F = x.shape

    # e[b, s] = sum_f x[b, s, f] * w[f]
    # VPU multiply + cross-lane (XLU) reduction; avoids a width-1 MXU matmul
    # that would waste 127/128 (255/256) of the MXU output lanes.
    e = jnp.sum(x * w[None, :, :], axis=-1)     # (bb, S) f32
    a = jnp.exp(jnp.tanh(e))                    # EUP transcendentals

    # sequence_mask: zero out positions >= valid_len (int32 compare).
    pos = lax.broadcasted_iota(jnp.int32, (bb, S), 1)
    a = jnp.where(pos < vl, a, 0.0)

    # a = a / sum(a, 1) + 1e-10  (epsilon OUTSIDE the division, as in PyTorch).
    # EUP approx reciprocal + one Newton refinement keeps ~f32 accuracy while
    # staying off the VALU divide path.
    # NOTE: like the PyTorch reference, a fully-masked row (valid_len == 0)
    # yields Inf/NaN here -- kept faithful on purpose.
    s = jnp.sum(a, axis=1, keepdims=True)       # (bb, 1)
    inv = pl.reciprocal(s, approx=True)
    inv = inv * (2.0 - s * inv)                 # Newton step
    a = a * inv + 1e-10

    # weighted_input = x * a[..., None]; pooled = sum over the step axis.
    pooled = jnp.sum(x * a[:, :, None], axis=1)  # (bb, F)

    out_ref[...] = pooled.astype(out_ref.dtype)
    a_ref[...] = a.astype(a_ref.dtype)


def _pick_batch_block(B, S, F, itemsize, target_bytes=4 << 20):
    """Largest batch tile whose x-block stays under `target_bytes`, divides B,
    and keeps the sublane constraint (multiple of 8, or the full batch)."""
    row_bytes = max(1, S * F * itemsize)
    max_bb = max(1, target_bytes // row_bytes)
    if B <= max_bb:
        return B
    for bb in range(int(max_bb), 0, -1):
        if B % bb == 0 and (bb % 8 == 0 or bb == B):
            return bb
    return B  # fallback: single block (correctness over tiling)


def self_attention(x, weight, valid_lens=None, *, batch_block=None):
    """x: (B, S, F), weight: (F, 1), valid_lens: (B,) int or None.
    Returns (pooled (B, F), a (B, S)) exactly as the PyTorch forward."""
    B, S, F = x.shape
    itemsize = jnp.dtype(x.dtype).itemsize

    if valid_lens is None:
        vl = jnp.full((B, 1), S, dtype=jnp.int32)
    else:
        vl = valid_lens.astype(jnp.int32).reshape(B, 1)

    # (F, 1) column parameter -> (1, F) lane-major row (pure reshape, no copy),
    # so the kernel broadcasts it along lanes without an in-kernel transpose.
    w_row = weight.reshape(1, F)

    bb = batch_block if batch_block is not None else _pick_batch_block(B, S, F, itemsize)
    assert B % bb == 0, "batch_block must divide the batch size"
    grid = (B // bb,)

    x_spec = pl.BlockSpec((bb, S, F), lambda i: (i, 0, 0))
    w_spec = pl.BlockSpec((1, F), lambda i: (0, 0))
    vl_spec = pl.BlockSpec((bb, 1), lambda i: (i, 0))
    out_spec = pl.BlockSpec((bb, F), lambda i: (i, 0))
    a_spec = pl.BlockSpec((bb, S), lambda i: (i, 0))

    # VMEM budget: double-buffered x blocks + a few f32 block-sized temporaries
    # (x*w, x*a) + double-buffered outputs + headroom.  Clamped so it also fits
    # v7x's 64 MiB per TensorCore.
    x_block_bytes = bb * S * F * itemsize
    temp_bytes = bb * S * F * 4
    out_bytes = (bb * F + bb * S) * itemsize + bb * 4
    need = 2 * x_block_bytes + 3 * temp_bytes + 2 * out_bytes + (2 << 20)
    vmem_limit = int(min(max(need, 16 << 20), 48 << 20))

    pooled, a = pl.pallas_call(
        _self_attention_kernel,
        grid=grid,
        in_specs=[x_spec, w_spec, vl_spec],
        out_specs=(out_spec, a_spec),
        out_shape=(
            jax.ShapeDtypeStruct((B, F), x.dtype),
            jax.ShapeDtypeStruct((B, S), x.dtype),
        ),
        compiler_params=pltpu.CompilerParams(
            dimension_semantics=("parallel",),   # batch blocks are independent
            vmem_limit_bytes=vmem_limit,
        ),
    )(x, w_row, vl)
    return pooled, a


def _reference(x, weight, valid_lens=None):
    """Pure-JAX reference mirroring the PyTorch forward."""
    B, S, F = x.shape
    e = jnp.tanh(jnp.reshape(jnp.reshape(x, (-1, F)) @ weight, (B, S)))
    a = jnp.exp(e)
    if valid_lens is not None:
        mask = jnp.arange(S)[None, :] < valid_lens[:, None]
        a = jnp.where(mask, a, 0.0)
    a = a / jnp.sum(a, axis=1, keepdims=True) + 1e-10
    return jnp.sum(x * a[:, :, None], axis=1), a


if __name__ == "__main__":
    B, S, F = 16, 8, 32   # batch, step_dim, feature_dim

    key = jax.random.PRNGKey(0)
    kx, kw = jax.random.split(key)

    x = jax.random.normal(kx, (B, S, F), dtype=jnp.float32)

    # Deterministic xavier_uniform init for weight (F, 1):
    # PyTorch fan_in = 1, fan_out = F  ->  bound = sqrt(6 / (F + 1))
    bound = (6.0 / (F + 1)) ** 0.5
    weight = jax.random.uniform(kw, (F, 1), dtype=jnp.float32,
                                minval=-bound, maxval=bound)

    valid_lens = jnp.array([8, 5, 3, 8, 1, 7, 2, 6, 8, 4, 5, 8, 3, 8, 6, 2],
                           dtype=jnp.int32)

    # batch_block=8 -> grid=(2,), exercising the tiled / pipelined path.
    pooled, a = self_attention(x, weight, valid_lens, batch_block=8)
    pooled = jax.block_until_ready(pooled)
    a = jax.block_until_ready(a)

    ref_pooled, ref_a = _reference(x, weight, valid_lens)
    assert jnp.allclose(pooled, ref_pooled, atol=1e-5, rtol=1e-5)
    assert jnp.allclose(a, ref_a, atol=1e-5, rtol=1e-5)

    # Also check the no-mask path (valid_lens=None) with auto tile selection.
    pooled2, a2 = self_attention(x, weight, None)
    ref_pooled2, ref_a2 = _reference(x, weight, None)
    assert jnp.allclose(jax.block_until_ready(pooled2), ref_pooled2, atol=1e-5, rtol=1e-5)
    assert jnp.allclose(jax.block_until_ready(a2), ref_a2, atol=1e-5, rtol=1e-5)

    print("KERNEL_OK")
</pallas_src>

<mosaic_0001>
module attributes {stable_mosaic.version = 11 : i64} {
  func.func @_self_attention_kernel(%arg0: i32, %arg1: memref<8x8x32xf32, #tpu.memory_space<vmem>>, %arg2: memref<1x32xf32, #tpu.memory_space<vmem>>, %arg3: memref<8x1xi32, #tpu.memory_space<vmem>>, %arg4: memref<8x32xf32, #tpu.memory_space<vmem>>, %arg5: memref<8x8xf32, #tpu.memory_space<vmem>>) attributes {dimension_semantics = [#tpu.dimension_semantics<parallel>], iteration_bounds = array<i64: 2>, scalar_prefetch = 0 : i64, scratch_operands = 0 : i64, tpu.core_type = #tpu.core_type<tc>, window_params = [{transform_indices = @transform_0, window_bounds = array<i64: 8, 8, 32>}, {pipeline_mode = #tpu.pipeline_mode<synchronous>, transform_indices = @transform_1, window_bounds = array<i64: 1, 32>}, {transform_indices = @transform_2, window_bounds = array<i64: 8, 1>}, {transform_indices = @transform_3, window_bounds = array<i64: 8, 32>}, {transform_indices = @transform_4, window_bounds = array<i64: 8, 8>}]} {
    %c0 = arith.constant 0 : index
    %c0_0 = arith.constant 0 : index
    %c0_1 = arith.constant 0 : index
    %0 = vector.load %arg1[%c0, %c0_0, %c0_1] : memref<8x8x32xf32, #tpu.memory_space<vmem>>, vector<8x8x32xf32>
    %c0_2 = arith.constant 0 : index
    %c0_3 = arith.constant 0 : index
    %1 = vector.load %arg2[%c0_2, %c0_3] : memref<1x32xf32, #tpu.memory_space<vmem>>, vector<1x32xf32>
    %c0_4 = arith.constant 0 : index
    %c0_5 = arith.constant 0 : index
    %2 = vector.load %arg3[%c0_4, %c0_5] : memref<8x1xi32, #tpu.memory_space<vmem>>, vector<8x1xi32>
    %3 = vector.shape_cast %1 : vector<1x32xf32> to vector<1x1x32xf32>
    %4 = vector.broadcast %3 : vector<1x1x32xf32> to vector<8x8x32xf32>
    %5 = arith.mulf %0, %4 : vector<8x8x32xf32>
    %cst = arith.constant dense<0.000000e+00> : vector<8x8xf32>
    %6 = vector.multi_reduction <add>, %5, %cst [2] : vector<8x8x32xf32> to vector<8x8xf32>
    %7 = math.tanh %6 : vector<8x8xf32>
    %8 = math.exp %7 : vector<8x8xf32>
    %9 = tpu.iota {dimensions = array<i32: 1>} : vector<8x8xi32>
    %10 = vector.broadcast %2 : vector<8x1xi32> to vector<8x8xi32>
    %11 = arith.cmpi slt, %9, %10 : vector<8x8xi32>
    %cst_6 = arith.constant 0.000000e+00 : f32
    %12 = vector.broadcast %cst_6 : f32 to vector<8x8xf32>
    %13 = arith.select %11, %8, %12 : vector<8x8xi1>, vector<8x8xf32>
    %cst_7 = arith.constant dense<0.000000e+00> : vector<8xf32>
    %14 = vector.multi_reduction <add>, %13, %cst_7 [1] : vector<8x8xf32> to vector<8xf32>
    %15 = vector.shape_cast %14 : vector<8xf32> to vector<8x1xf32>
    %16 = tpu.reciprocal %15 {approx = true} : vector<8x1xf32> -> vector<8x1xf32>
    %17 = arith.mulf %15, %16 : vector<8x1xf32>
    %cst_8 = arith.constant 2.000000e+00 : f32
    %18 = vector.broadcast %cst_8 : f32 to vector<8x1xf32>
    %19 = arith.subf %18, %17 : vector<8x1xf32>
    %20 = arith.mulf %16, %19 : vector<8x1xf32>
    %21 = vector.broadcast %20 : vector<8x1xf32> to vector<8x8xf32>
    %22 = arith.mulf %13, %21 : vector<8x8xf32>
    %cst_9 = arith.constant 1.000000e-10 : f32
    %23 = vector.broadcast %cst_9 : f32 to vector<8x8xf32>
    %24 = arith.addf %22, %23 : vector<8x8xf32>
    %25 = vector.shape_cast %24 : vector<8x8xf32> to vector<8x8x1xf32>
    %26 = vector.broadcast %25 : vector<8x8x1xf32> to vector<8x8x32xf32>
    %27 = arith.mulf %0, %26 : vector<8x8x32xf32>
    %cst_10 = arith.constant dense<0.000000e+00> : vector<8x32xf32>
    %28 = vector.multi_reduction <add>, %27, %cst_10 [1] : vector<8x8x32xf32> to vector<8x32xf32>
    %c0_11 = arith.constant 0 : index
    %c0_12 = arith.constant 0 : index
    %29 = vector.load %arg4[%c0_11, %c0_12] : memref<8x32xf32, #tpu.memory_space<vmem>>, vector<8x32xf32>
    tpu.vector_store %arg4[%c0_11, %c0_12], %28 {strides = array<i32>} : memref<8x32xf32, #tpu.memory_space<vmem>>, vector<8x32xf32>,
    %c0_13 = arith.constant 0 : index
    %c0_14 = arith.constant 0 : index
    %30 = vector.load %arg5[%c0_13, %c0_14] : memref<8x8xf32, #tpu.memory_space<vmem>>, vector<8x8xf32>
    tpu.vector_store %arg5[%c0_13, %c0_14], %24 {strides = array<i32>} : memref<8x8xf32, #tpu.memory_space<vmem>>, vector<8x8xf32>,
    return
  }
  func.func @transform_0(%arg0: i32) -> (i32, i32, i32) {
    %c0_i32 = arith.constant 0 : i32
    %c0_i32_0 = arith.constant 0 : i32
    %c0_i32_1 = arith.constant 0 : i32
    return %arg0, %c0_i32, %c0_i32_0 : i32, i32, i32
  }
  func.func @transform_1(%arg0: i32) -> (i32, i32) {
    %c0_i32 = arith.constant 0 : i32
    %c0_i32_0 = arith.constant 0 : i32
    %c0_i32_1 = arith.constant 0 : i32
    return %c0_i32, %c0_i32_0 : i32, i32
  }
  func.func @transform_2(%arg0: i32) -> (i32, i32) {
    %c0_i32 = arith.constant 0 : i32
    %c0_i32_0 = arith.constant 0 : i32
    return %arg0, %c0_i32 : i32, i32
  }
  func.func @transform_3(%arg0: i32) -> (i32, i32) {
    %c0_i32 = arith.constant 0 : i32
    %c0_i32_0 = arith.constant 0 : i32
    return %arg0, %c0_i32 : i32, i32
  }
  func.func @transform_4(%arg0: i32) -> (i32, i32) {
    %c0_i32 = arith.constant 0 : i32
    %c0_i32_0 = arith.constant 0 : i32
    return %arg0, %c0_i32 : i32, i32
  }
}

</mosaic_0001>

<llo_original>
// kernel: tpu_custom_call.1
$region0: #{tpu_custom_call.1}
  #allocation0 [shape = 'u32[]', space=smem, size = 0x4, offset = 0x4, fixed_abs, tag = 'smem constant byte address 0x4 - core index']
  #allocation1 [shape = 'u32[72,128]{1,0:T(1,128)}', space=vmem, size = 0x9000, scoped, tag = 'internal scratch']
  %s0 = inlined_call_operand.hbm [shape: f32[16,8,32], index: 0, kind: input, shape index: {}]
  %s1 = inlined_call_operand.vmem [shape: f32[1,32], index: 1, kind: input, shape index: {}]
  %s2 = inlined_call_operand.vmem [shape: s32[16,1], index: 2, kind: input, shape index: {}]
  %s3 = inlined_call_operand.hbm [shape: f32[16,32], index: 3, kind: output, shape index: {0}]
  %s4 = inlined_call_operand.vmem [shape: f32[16,8], index: 4, kind: output, shape index: {1}]
  %5 = xla_tuple %s3, %s4
  %s6 = sld [smem:[#allocation0]]
  $region57: #{tpu_custom_call.1} parent=0
    _
  %s8 = ssub.s32 1, %s6
  %s9 = scalar_select 0, %s8, %s6
  $region1: #{tpu_custom_call.1} parent=0
    #allocation2 [shape = 'u8[65536]{0}', space=vmem, size = 0x10000, scoped, tag = 'input window, operand 0']
    #allocation3 [shape = 's32[2]{0}', space=sflag, size = 0x8, scoped, tag = 'scoped memory for tpu_custom_call.1']
    #allocation4 [shape = 's32[2]{0}', space=sflag, size = 0x8, scoped, tag = 'scoped memory for tpu_custom_call.1']
    #allocation5 [shape = 'u8[8192]{0}', space=vmem, size = 0x2000, scoped, tag = 'output window, operand 0']
    %10 = vsyncpa [#allocation3], 0
    %s11 = scalar_lea.sflag [#allocation3], 1
    %12 = vsyncpa %s11, 0
    %13 = vsyncpa [#allocation4], 0
    %s14 = scalar_lea.sflag [#allocation4], 1
    %15 = vsyncpa %s14, 0
    loop: start=0, step=1, limit=4
    $region2: #{tpu_custom_call.1} parent=1 // loop_pre_header
      _
    $region3: #{tpu_custom_call.1} parent=1 // loop_header
      %s17 = sphi 0, %s21
      %p18 = scmp.ge.s32.totalorder %s17, 4
      %s27 = sphi 0, %s29
      %s30 = sphi 0, %s27
      %s31 = sphi 0, %s30
      %s47 = sphi 0, %s31
      %s51 = sphi 0, %s51
      %s53 = sphi 0, %s51
      %s54 = sphi 0, %s53
      %s68 = sphi 0, %s54
      %s74 = sphi 0, %s76
      %s77 = sphi 0, %s74
      %s78 = sphi 0, %s77
      %s94 = sphi 0, %s78
      %s100 = sphi 0, %s102
      %s103 = sphi 0, %s100
      %s104 = sphi 0, %s103
      %s120 = sphi 0, %s104
      %s126 = sphi 0, %s128
      %s129 = sphi 0, %s126
      %s130 = sphi 0, %s129
      %s146 = sphi 0, %s130
    $region4: #{tpu_custom_call.1} parent=1 // loop_header_branch
      %20 = sbr.rel (%p18) target = $region8
    $region5: #{tpu_custom_call.1} parent=1 // loop_body
      %s22 = ssub.s32 %s17, 1
      %s23 = ssub.s32 %s17, 2
      %s24 = sadd.s32 %s17, 1
      %s25 = ssub.s32 %s17, %s24
      %p26 = scmp.eq.s32.totalorder %s25, 0
      %s28 = sadd.s32 %s27, 1
      %s29 = scalar_select %p26, %s27, %s28
      %p32 = pneg %p26
      %p33 = scmp.eq.s32.totalorder %s17, 1
      %p34 = por %p32, %p33
      %p35 = scmp.ne.s32.totalorder %s27, %s30
      %p36 = scmp.eq.s32.totalorder %s17, 0
      %p37 = por %p35, %p36
      %p38 = scmp.ne.s32.totalorder %s27, %s30
      %p39 = scmp.eq.s32.totalorder %s22, 1
      %p40 = por %p38, %p39
      %p41 = scmp.ne.s32.totalorder %s30, %s31
      %p42 = scmp.eq.s32.totalorder %s22, 0
      %p43 = por %p41, %p42
      %p44 = scmp.ne.s32.totalorder %s30, %s31
      %p45 = scmp.eq.s32.totalorder %s23, 1
      %p46 = por %p44, %p45
      %p48 = scmp.ne.s32.totalorder %s31, %s47
      %p49 = scmp.eq.s32.totalorder %s23, 0
      %p50 = por %p48, %p49
      %s52 = sadd.s32 %s51, 1
      %p55 = scmp.eq.s32.totalorder %s17, 1
      %p56 = scmp.ne.s32.totalorder %s51, %s53
      %p57 = scmp.eq.s32.totalorder %s17, 0
      %p58 = por %p56, %p57
      %p59 = scmp.ne.s32.totalorder %s51, %s53
      %p60 = scmp.eq.s32.totalorder %s22, 1
      %p61 = por %p59, %p60
      %p62 = scmp.ne.s32.totalorder %s53, %s54
      %p63 = scmp.eq.s32.totalorder %s22, 0
      %p64 = por %p62, %p63
      %p65 = scmp.ne.s32.totalorder %s53, %s54
      %p66 = scmp.eq.s32.totalorder %s23, 1
      %p67 = por %p65, %p66
      %p69 = scmp.ne.s32.totalorder %s54, %s68
      %p70 = scmp.eq.s32.totalorder %s23, 0
      %p71 = por %p69, %p70
      %s72 = ssub.s32 %s17, %s24
      %p73 = scmp.eq.s32.totalorder %s72, 0
      %s75 = sadd.s32 %s74, 1
      %s76 = scalar_select %p73, %s74, %s75
      %p79 = pneg %p73
      %p80 = scmp.eq.s32.totalorder %s17, 1
      %p81 = por %p79, %p80
      %p82 = scmp.ne.s32.totalorder %s74, %s77
      %p83 = scmp.eq.s32.totalorder %s17, 0
      %p84 = por %p82, %p83
      %p85 = scmp.ne.s32.totalorder %s74, %s77
      %p86 = scmp.eq.s32.totalorder %s22, 1
      %p87 = por %p85, %p86
      %p88 = scmp.ne.s32.totalorder %s77, %s78
      %p89 = scmp.eq.s32.totalorder %s22, 0
      %p90 = por %p88, %p89
      %p91 = scmp.ne.s32.totalorder %s77, %s78
      %p92 = scmp.eq.s32.totalorder %s23, 1
      %p93 = por %p91, %p92
      %p95 = scmp.ne.s32.totalorder %s78, %s94
      %p96 = scmp.eq.s32.totalorder %s23, 0
      %p97 = por %p95, %p96
      %s98 = ssub.s32 %s17, %s24
      %p99 = scmp.eq.s32.totalorder %s98, 0
      %s101 = sadd.s32 %s100, 1
      %s102 = scalar_select %p99, %s100, %s101
      %p105 = pneg %p99
      %p106 = scmp.eq.s32.totalorder %s17, 1
      %p107 = por %p105, %p106
      %p108 = scmp.ne.s32.totalorder %s100, %s103
      %p109 = scmp.eq.s32.totalorder %s17, 0
      %p110 = por %p108, %p109
      %p111 = scmp.ne.s32.totalorder %s100, %s103
      %p112 = scmp.eq.s32.totalorder %s22, 1
      %p113 = por %p111, %p112
      %p114 = scmp.ne.s32.totalorder %s103, %s104
      %p115 = scmp.eq.s32.totalorder %s22, 0
      %p116 = por %p114, %p115
      %p117 = scmp.ne.s32.totalorder %s103, %s104
      %p118 = scmp.eq.s32.totalorder %s23, 1
      %p119 = por %p117, %p118
      %p121 = scmp.ne.s32.totalorder %s104, %s120
      %p122 = scmp.eq.s32.totalorder %s23, 0
      %p123 = por %p121, %p122
      %s124 = ssub.s32 %s17, %s24
      %p125 = scmp.eq.s32.totalorder %s124, 0
      %s127 = sadd.s32 %s126, 1
      %s128 = scalar_select %p125, %s126, %s127
      %p131 = pneg %p125
      %p132 = scmp.eq.s32.totalorder %s17, 1
      %p133 = por %p131, %p132
      %p134 = scmp.ne.s32.totalorder %s126, %s129
      %p135 = scmp.eq.s32.totalorder %s17, 0
      %p136 = por %p134, %p135
      %p137 = scmp.ne.s32.totalorder %s126, %s129
      %p138 = scmp.eq.s32.totalorder %s22, 1
      %p139 = por %p137, %p138
      %p140 = scmp.ne.s32.totalorder %s129, %s130
      %p141 = scmp.eq.s32.totalorder %s22, 0
      %p142 = por %p140, %p141
      %p143 = scmp.ne.s32.totalorder %s129, %s130
      %p144 = scmp.eq.s32.totalorder %s23, 1
      %p145 = por %p143, %p144
      %p147 = scmp.ne.s32.totalorder %s130, %s146
      %p148 = scmp.eq.s32.totalorder %s23, 0
      %p149 = por %p147, %p148
      %p150 = scmp.le.s32.totalorder 1, %s17
      %p151 = scmp.lt.s32.totalorder %s17, 3
      %p152 = pnand %p150, %p151
      %p153 = pneg %p152
      // Predicated region
      $region9: #{tpu_custom_call.1} parent=5 // pred_check
        _
      $region10: #{tpu_custom_call.1} parent=5 // pred_check_branch
        %155 = sbr.rel (%p152) target = $region12
      $region11: #{tpu_custom_call.1} parent=5 // pred_region
        %s156 = ssub.s32 %s17, 1
        // Predicated region
        $region13: #{tpu_custom_call.1} parent=11 // pred_check
          %p157 = pneg %p64
        $region14: #{tpu_custom_call.1} parent=11 // pred_check_branch
          %159 = sbr.rel (%p157) target = $region16
        $region15: #{tpu_custom_call.1} parent=11 // pred_region
          _
        $region16: #{tpu_custom_call.1} parent=11 // pred_fallthru
          _
      $region12: #{tpu_custom_call.1} parent=5 // pred_fallthru
        _
      %p160 = scmp.lt.s32.totalorder %s17, 2
      // Predicated region
      $region17: #{tpu_custom_call.1} parent=5 // pred_check
        %p161 = pneg %p160
      $region18: #{tpu_custom_call.1} parent=5 // pred_check_branch
        %163 = sbr.rel (%p161) target = $region20
      $region19: #{tpu_custom_call.1} parent=5 // pred_region
        // Predicated region
        $region21: #{tpu_custom_call.1} parent=19 // pred_check
          %p164 = pneg %p37
        $region22: #{tpu_custom_call.1} parent=19 // pred_check_branch
          %166 = sbr.rel (%p164) target = $region24
        $region23: #{tpu_custom_call.1} parent=19 // pred_region
          %s167 = sand.u32 %s27, 1
          %s168 = scalar_lea.sflag [#allocation3], %s167
          %s169 = sand.u32 %s27, 1
          %s170 = smul.addr %s169, 64
          %s171 = scalar_lea.vmem [#allocation2], %s170
          %s172 = smul.u32 8, %s17
          %174 = vsyncadd %s168, 0
          %s175 = smul.addr %s172, 8
          %s176 = scalar_lea.hbm %s0, %s175
          %s177 = sshll.u32 %s176, 4
          %s178 = int_to_ptr.hbm [resolvable:$true] %s177
          %s179 = sshll.u32 %s171, 4
          %s180 = int_to_ptr.vmem [resolvable:$true] %s179
          %185 = dma.hbm_to_vmem [thread:$0]  %s178, 1024, %s180, %s168, 128, 128, 8
        $region24: #{tpu_custom_call.1} parent=19 // pred_fallthru
          _
        // Predicated region
        $region25: #{tpu_custom_call.1} parent=19 // pred_check
          %p186 = pneg %p84
        $region26: #{tpu_custom_call.1} parent=19 // pred_check_branch
          %188 = sbr.rel (%p186) target = $region28
        $region27: #{tpu_custom_call.1} parent=19 // pred_region
          %p189 = scmp.lt.s32.totalorder %s17, 1
          %s190 = scalar_select %p189, %s17, 1
          %s191 = smul.addr %s190, 8
          %s192 = scalar_lea.vmem %s2, %s191
        $region28: #{tpu_custom_call.1} parent=19 // pred_fallthru
          _
      $region20: #{tpu_custom_call.1} parent=5 // pred_fallthru
        _
      %p193 = scmp.le.s32.totalorder 1, %s17
      %p194 = scmp.lt.s32.totalorder %s17, 3
      %p195 = pnand %p193, %p194
      %p196 = pneg %p195
      // Predicated region
      $region29: #{tpu_custom_call.1} parent=5 // pred_check
        _
      $region30: #{tpu_custom_call.1} parent=5 // pred_check_branch
        %198 = sbr.rel (%p195) target = $region32
      $region31: #{tpu_custom_call.1} parent=5 // pred_region
        %s199 = ssub.s32 %s17, 1
        %s200 = sand.u32 %s30, 1
        %s201 = scalar_lea.sflag [#allocation3], %s200
        %s202 = sand.u32 %s30, 1
        %s203 = smul.addr %s202, 64
        %s204 = scalar_lea.vmem [#allocation2], %s203
        // Predicated region
        $region33: #{tpu_custom_call.1} parent=31 // pred_check
          %p205 = pneg %p43
        $region34: #{tpu_custom_call.1} parent=31 // pred_check_branch
          %207 = sbr.rel (%p205) target = $region36
        $region35: #{tpu_custom_call.1} parent=31 // pred_region
          %209 = dma.done %s201, 1024
        $region36: #{tpu_custom_call.1} parent=31 // pred_fallthru
          _
        %s210 = sand.u32 %s30, 1
        %s211 = scalar_lea.sflag [#allocation3], %s210
        %s212 = sand.u32 %s30, 1
        %s213 = smul.addr %s212, 64
        %s214 = scalar_lea.vmem [#allocation2], %s213
        %p215 = pneg %p43
        %p216 = pneg %p40
        %p217 = pneg %p64
        %p218 = pneg %p61
        %p219 = scmp.lt.s32.totalorder %s22, 1
        %s220 = scalar_select %p219, %s22, 1
        %s221 = smul.addr %s220, 8
        %s222 = scalar_lea.vmem %s2, %s221
        %p223 = pneg %p90
        %p224 = pneg %p87
        %p225 = pneg %p116
        %p226 = pneg %p113
        %s227 = sand.u32 %s103, 1
        %s228 = scalar_lea.sflag [#allocation4], %s227
        %s229 = sand.u32 %s103, 1
        %s230 = smul.addr %s229, 8
        %s231 = scalar_lea.vmem [#allocation5], %s230
        %p232 = pneg %p142
        %p233 = pneg %p139
        %p234 = scmp.lt.s32.totalorder %s22, 1
        %s235 = scalar_select %p234, %s22, 1
        %s236 = smul.addr %s235, 8
        %s237 = scalar_lea.vmem %s4, %s236
        %s238 = smul.u32 8, %s22
        %p239 = scmp.lt.s32.totalorder %s22, 1
        %s240 = scalar_select %p239, %s22, 1
        %s241 = smul.addr %s240, 8
        %s242 = scalar_lea.vmem %s2, %s241
        %p243 = scmp.lt.s32.totalorder %s22, 1
        %s244 = scalar_select %p243, %s22, 1
        %s245 = smul.addr %s244, 8
        %s246 = scalar_lea.vmem %s4, %s245
        %v247 = vld [vmem:[%s204] sm:$0xff]
        %v248 = vld [vmem:[%s204 + $0x8] sm:$0xff]
        %v249 = vld [vmem:[%s204 + $0x10] sm:$0xff]
        %v250 = vld [vmem:[%s204 + $0x18] sm:$0xff]
        %v251 = vld [vmem:[%s204 + $0x20] sm:$0xff]
        %v252 = vld [vmem:[%s204 + $0x28] sm:$0xff]
        %v253 = vld [vmem:[%s204 + $0x30] sm:$0xff]
        %v254 = vld [vmem:[%s204 + $0x38] sm:$0xff]
        %v255 = vld [vmem:[%s1] sm:$0x1]
        %v256 = vld [vmem:[%s242] sm:$0xff]
        %v258 = vperm.slane %v255, 0
        %v260 = vmul.f32 %v247, %v258
        %v261 = vmul.f32 %v248, %v258
        %v262 = vmul.f32 %v249, %v258
        %v263 = vmul.f32 %v250, %v258
        %v264 = vmul.f32 %v251, %v258
        %v265 = vmul.f32 %v252, %v258
        %v266 = vmul.f32 %v253, %v258
        %v267 = vmul.f32 %v254, %v258
        %vm268 = vcmask 261120
        %v269 = vsel %vm268, %v260, 0.0
        %270 = vadd.xlane.f32.xlu0 %v269
        %v271 = vpop.xlane.xlu0 %270
        %v272 = vsel %vm268, %v261, 0.0
        %273 = vadd.xlane.f32.xlu0 %v272
        %v274 = vpop.xlane.xlu0 %273
        %v275 = vsel %vm268, %v262, 0.0
        %276 = vadd.xlane.f32.xlu0 %v275
        %v277 = vpop.xlane.xlu0 %276
        %v278 = vsel %vm268, %v263, 0.0
        %279 = vadd.xlane.f32.xlu0 %v278
        %v280 = vpop.xlane.xlu0 %279
        %v281 = vsel %vm268, %v264, 0.0
        %282 = vadd.xlane.f32.xlu0 %v281
        %v283 = vpop.xlane.xlu0 %282
        %v284 = vsel %vm268, %v265, 0.0
        %285 = vadd.xlane.f32.xlu0 %v284
        %v286 = vpop.xlane.xlu0 %285
        %v287 = vsel %vm268, %v266, 0.0
        %288 = vadd.xlane.f32.xlu0 %v287
        %v289 = vpop.xlane.xlu0 %288
        %v290 = vsel %vm268, %v267, 0.0
        %291 = vadd.xlane.f32.xlu0 %v290
        %v292 = vpop.xlane.xlu0 %291
        %v293 = vtanh.pop %v271
        %v294 = vtanh.pop %v274
        %v295 = vtanh.pop %v277
        %v296 = vtanh.pop %v280
        %v297 = vtanh.pop %v283
        %v298 = vtanh.pop %v286
        %v299 = vtanh.pop %v289
        %v300 = vtanh.pop %v292
        %v301 = vmul.f32 %v293, 1.442695
        %v302 = vpow.pop %v301
        %v303 = vmul.f32 %v294, 1.442695
        %v304 = vpow.pop %v303
        %v305 = vmul.f32 %v295, 1.442695
        %v306 = vpow.pop %v305
        %v307 = vmul.f32 %v296, 1.442695
        %v308 = vpow.pop %v307
        %v309 = vmul.f32 %v297, 1.442695
        %v310 = vpow.pop %v309
        %v311 = vmul.f32 %v298, 1.442695
        %v312 = vpow.pop %v311
        %v313 = vmul.f32 %v299, 1.442695
        %v314 = vpow.pop %v313
        %v315 = vmul.f32 %v300, 1.442695
        %v316 = vpow.pop %v315
        %v317 = vlaneseq
        %v318 = vand.u32 %v317, 127
        %319 = vset.pattern.permute.xlu0 0
        %320 = vperm.xlu0 %319, %v256
        %v321 = vpop.permute.xlu0 %320
        %vm322 = vcmp.lt.s32.totalorder %v318, %v321
        %v331 = vperm.slane %v302, %v318
        %v332 = vperm.slane %v304, %v318
        %v333 = vperm.slane %v306, %v318
        %v334 = vperm.slane %v308, %v318
        %v335 = vperm.slane %v310, %v318
        %v336 = vperm.slane %v312, %v318
        %v337 = vperm.slane %v314, %v318
        %v338 = vperm.slane %v316, %v318
        %vm339 = vcmask 1041409
        %v340 = vsel %vm339, %v332, %v331
        %vm341 = vcmask 1042434
        %v342 = vsel %vm341, %v333, %v340
        %vm343 = vcmask 1043459
        %v344 = vsel %vm343, %v334, %v342
        %vm345 = vcmask 1044484
        %v346 = vsel %vm345, %v335, %v344
        %vm347 = vcmask 1045509
        %v348 = vsel %vm347, %v336, %v346
        %vm349 = vcmask 1046534
        %v350 = vsel %vm349, %v337, %v348
        %vm351 = vcmask 1047559
        %v352 = vsel %vm351, %v338, %v350
        %v354 = vsel %vm322, %v352, 0.0
        %vm355 = vcmask 64512
        %v356 = vsel %vm355, %v354, 0.0
        %357 = vadd.xlane.f32.xlu0 %v356
        %v358 = vpop.xlane.xlu0 %357
        %v359 = vrcp.pop %v358
        %v360 = vmul.f32 %v358, %v359
        %v361 = vsub.f32 2.0, %v360
        %v362 = vmul.f32 %v359, %v361
        %v363 = vmul.f32 %v354, %v362
        %v364 = vadd.f32 %v363, 1e-10
        %v365 = vperm.slane %v364, 0
        %v366 = vlaneseq
        %v367 = vshrl.u32 %v366, 7
        %369 = vset.pattern.permute.xlu0 %v367
        %370 = vperm.xlu0 %369, %v365
        %v371 = vpop.permute.xlu0 %370
        %v372 = vperm.slane %v364, 1
        %v373 = vlaneseq
        %v374 = vshrl.u32 %v373, 7
        %376 = vset.pattern.permute.xlu0 %v374
        %377 = vperm.xlu0 %376, %v372
        %v378 = vpop.permute.xlu0 %377
        %v379 = vperm.slane %v364, 2
        %v380 = vlaneseq
        %v381 = vshrl.u32 %v380, 7
        %383 = vset.pattern.permute.xlu0 %v381
        %384 = vperm.xlu0 %383, %v379
        %v385 = vpop.permute.xlu0 %384
        %v386 = vperm.slane %v364, 3
        %v387 = vlaneseq
        %v388 = vshrl.u32 %v387, 7
        %390 = vset.pattern.permute.xlu0 %v388
        %391 = vperm.xlu0 %390, %v386
        %v392 = vpop.permute.xlu0 %391
        %v393 = vperm.slane %v364, 4
        %v394 = vlaneseq
        %v395 = vshrl.u32 %v394, 7
        %397 = vset.pattern.permute.xlu0 %v395
        %398 = vperm.xlu0 %397, %v393
        %v399 = vpop.permute.xlu0 %398
        %v400 = vperm.slane %v364, 5
        %v401 = vlaneseq
        %v402 = vshrl.u32 %v401, 7
        %404 = vset.pattern.permute.xlu0 %v402
        %405 = vperm.xlu0 %404, %v400
        %v406 = vpop.permute.xlu0 %405
        %v407 = vperm.slane %v364, 6
        %v408 = vlaneseq
        %v409 = vshrl.u32 %v408, 7
        %411 = vset.pattern.permute.xlu0 %v409
        %412 = vperm.xlu0 %411, %v407
        %v413 = vpop.permute.xlu0 %412
        %v414 = vperm.slane %v364, 7
        %v415 = vlaneseq
        %v416 = vshrl.u32 %v415, 7
        %418 = vset.pattern.permute.xlu0 %v416
        %419 = vperm.xlu0 %418, %v414
        %v420 = vpop.permute.xlu0 %419
        %v421 = vmul.f32 %v247, %v371
        %v422 = vmul.f32 %v248, %v378
        %v423 = vmul.f32 %v249, %v385
        %v424 = vmul.f32 %v250, %v392
        %v425 = vmul.f32 %v251, %v399
        %v426 = vmul.f32 %v252, %v406
        %v427 = vmul.f32 %v253, %v413
        %v428 = vmul.f32 %v254, %v420
        %v429 = vsel %vm268, %v421, 0.0
        %v430 = vrot.slane %v429, 4
        %v431 = vadd.f32 %v429, %v430
        %v432 = vrot.slane %v431, 2
        %v433 = vadd.f32 %v431, %v432
        %v434 = vrot.slane %v433, 1
        %v435 = vadd.f32 %v433, %v434
        %v436 = vsel %vm268, %v422, 0.0
        %v437 = vrot.slane %v436, 4
        %v438 = vadd.f32 %v436, %v437
        %v439 = vrot.slane %v438, 2
        %v440 = vadd.f32 %v438, %v439
        %v441 = vrot.slane %v440, 1
        %v442 = vadd.f32 %v440, %v441
        %v443 = vsel %vm268, %v423, 0.0
        %v444 = vrot.slane %v443, 4
        %v445 = vadd.f32 %v443, %v444
        %v446 = vrot.slane %v445, 2
        %v447 = vadd.f32 %v445, %v446
        %v448 = vrot.slane %v447, 1
        %v449 = vadd.f32 %v447, %v448
        %v450 = vsel %vm268, %v424, 0.0
        %v451 = vrot.slane %v450, 4
        %v452 = vadd.f32 %v450, %v451
        %v453 = vrot.slane %v452, 2
        %v454 = vadd.f32 %v452, %v453
        %v455 = vrot.slane %v454, 1
        %v456 = vadd.f32 %v454, %v455
        %v457 = vsel %vm268, %v425, 0.0
        %v458 = vrot.slane %v457, 4
        %v459 = vadd.f32 %v457, %v458
        %v460 = vrot.slane %v459, 2
        %v461 = vadd.f32 %v459, %v460
        %v462 = vrot.slane %v461, 1
        %v463 = vadd.f32 %v461, %v462
        %v464 = vsel %vm268, %v426, 0.0
        %v465 = vrot.slane %v464, 4
        %v466 = vadd.f32 %v464, %v465
        %v467 = vrot.slane %v466, 2
        %v468 = vadd.f32 %v466, %v467
        %v469 = vrot.slane %v468, 1
        %v470 = vadd.f32 %v468, %v469
        %v471 = vsel %vm268, %v427, 0.0
        %v472 = vrot.slane %v471, 4
        %v473 = vadd.f32 %v471, %v472
        %v474 = vrot.slane %v473, 2
        %v475 = vadd.f32 %v473, %v474
        %v476 = vrot.slane %v475, 1
        %v477 = vadd.f32 %v475, %v476
        %v478 = vsel %vm268, %v428, 0.0
        %v479 = vrot.slane %v478, 4
        %v480 = vadd.f32 %v478, %v479
        %v481 = vrot.slane %v480, 2
        %v482 = vadd.f32 %v480, %v481
        %v483 = vrot.slane %v482, 1
        %v484 = vadd.f32 %v482, %v483
        %v493 = vsel %vm339, %v442, %v435
        %v494 = vsel %vm341, %v449, %v493
        %v495 = vsel %vm343, %v456, %v494
        %v496 = vsel %vm345, %v463, %v495
        %v497 = vsel %vm347, %v470, %v496
        %v498 = vsel %vm349, %v477, %v497
        %v499 = vsel %vm351, %v484, %v498
        %501 = vst.msk [vmem:[%s231] sm:$0xff] %vm268, %v499
        %502 = vst.msk [vmem:[%s246] sm:$0xff] %vm355, %v364
        %s503 = sand.u32 %s103, 1
        %s504 = scalar_lea.sflag [#allocation4], %s503
        %s505 = sand.u32 %s103, 1
        %s506 = smul.addr %s505, 8
        %s507 = scalar_lea.vmem [#allocation5], %s506
        %p508 = scmp.lt.s32.totalorder %s22, 1
        %s509 = scalar_select %p508, %s22, 1
        %s510 = smul.addr %s509, 8
        %s511 = scalar_lea.vmem %s4, %s510
        // Predicated region
        $region37: #{tpu_custom_call.1} parent=31 // pred_check
          %p512 = pneg %p113
        $region38: #{tpu_custom_call.1} parent=31 // pred_check_branch
          %514 = sbr.rel (%p512) target = $region40
        $region39: #{tpu_custom_call.1} parent=31 // pred_region
          %516 = vsyncadd %s504, 0
          %s517 = smul.addr %s22, 8
          %s518 = scalar_lea.hbm %s3, %s517
          %s520 = sshll.u32 %s507, 4
          %s521 = int_to_ptr.vmem [resolvable:$true] %s520
          %s522 = sshll.u32 %s518, 4
          %s523 = int_to_ptr.hbm [resolvable:$true] %s522
          %525 = dma.vmem_to_hbm [thread:$0]  %s521, 128, %s523, %s504
        $region40: #{tpu_custom_call.1} parent=31 // pred_fallthru
          _
        // Predicated region
        $region41: #{tpu_custom_call.1} parent=31 // pred_check
          %p526 = pneg %p139
        $region42: #{tpu_custom_call.1} parent=31 // pred_check_branch
          %528 = sbr.rel (%p526) target = $region44
        $region43: #{tpu_custom_call.1} parent=31 // pred_region
          _
        $region44: #{tpu_custom_call.1} parent=31 // pred_fallthru
          _
      $region32: #{tpu_custom_call.1} parent=5 // pred_fallthru
        _
      %p529 = scmp.le.s32.totalorder 2, %s17
      // Predicated region
      $region45: #{tpu_custom_call.1} parent=5 // pred_check
        %p530 = pneg %p529
      $region46: #{tpu_custom_call.1} parent=5 // pred_check_branch
        %532 = sbr.rel (%p530) target = $region48
      $region47: #{tpu_custom_call.1} parent=5 // pred_region
        %s533 = ssub.s32 %s17, 2
        // Predicated region
        $region49: #{tpu_custom_call.1} parent=47 // pred_check
          %p534 = pneg %p119
        $region50: #{tpu_custom_call.1} parent=47 // pred_check_branch
          %536 = sbr.rel (%p534) target = $region52
        $region51: #{tpu_custom_call.1} parent=47 // pred_region
          %s537 = sand.u32 %s104, 1
          %s538 = scalar_lea.sflag [#allocation4], %s537
          %s539 = sand.u32 %s104, 1
          %s540 = smul.addr %s539, 8
          %s541 = scalar_lea.vmem [#allocation5], %s540
          %543 = dma.done %s538, 128
        $region52: #{tpu_custom_call.1} parent=47 // pred_fallthru
          _
        // Predicated region
        $region53: #{tpu_custom_call.1} parent=47 // pred_check
          %p544 = pneg %p145
        $region54: #{tpu_custom_call.1} parent=47 // pred_check_branch
          %546 = sbr.rel (%p544) target = $region56
        $region55: #{tpu_custom_call.1} parent=47 // pred_region
          %p547 = scmp.lt.s32.totalorder %s23, 1
          %s548 = scalar_select %p547, %s23, 1
          %s549 = smul.addr %s548, 8
          %s550 = scalar_lea.vmem %s4, %s549
        $region56: #{tpu_custom_call.1} parent=47 // pred_fallthru
          _
      $region48: #{tpu_custom_call.1} parent=5 // pred_fallthru
        _
    $region6: #{tpu_custom_call.1} parent=1 // loop_footer
      %s21 = sadd.s32 1, %s17
    $region7: #{tpu_custom_call.1} parent=1 // loop_footer_branch
      %16 = sbr.rel target = $region3
    $region8: #{tpu_custom_call.1} parent=1 // loop_exit
      _
    %551 = vsyncpa [#allocation3], 1
    %s552 = scalar_lea.sflag [#allocation3], 1
    %553 = vsyncpa %s552, 1
    %554 = vsyncpa [#allocation4], 1
    %s555 = scalar_lea.sflag [#allocation4], 1
    %556 = vsyncpa %s555, 1

</llo_original>
